<compile_context>
chip_gen: v7x
topology: tpu7x:2x2x1
jax: 0.10.0
libtpu: 0.0.40
codegen_flags: <defaults>
</compile_context>

<pallas_src>
import functools

import jax
import jax.numpy as jnp
from jax import lax
from jax.experimental import pallas as pl
from jax.experimental.pallas import tpu as pltpu

_TILE_BUDGET_BYTES = 24 * 1024 * 1024   # input double-buffer + f32 accumulators
_VMEM_LIMIT_BYTES = 48 * 1024 * 1024    # leaves headroom even on v7x (64 MiB/TC)
_MAX_ROW_TILE = 256                     # multiple of 8; >1 row tile => megacore


def _round_down_multiple(x, m):
    return (x // m) * m


def _choose_tiles(R, F, itemsize, budget_bytes):
    """Pick (TR, TF) row/feature tiles.

    TR is the full row extent for small R (block dim == array dim is always
    legal), otherwise a multiple of 8 so the row grid axis can be sharded across
    TensorCores.  TF is as large as the VMEM budget allows (multiple of 128), or
    the full feature extent if that already fits, so each grid step moves a big
    contiguous DMA (per-step overhead ~0.35us amortized).
    """
    TR = R if R <= _MAX_ROW_TILE else _MAX_ROW_TILE
    # bytes held in VMEM per feature column: 2 input buffers + 2 f32 accumulators
    per_col = TR * (2 * itemsize + 2 * 4)
    tf_cap = max(128, _round_down_multiple(budget_bytes // per_col, 128))
    TF = F if F <= tf_cap else tf_cap
    return TR, TF


def _minmax_single_tile_kernel(x_ref, min_ref, max_ref):
    """Whole feature extent fits in one tile: reduce directly, no scratch."""
    blk = x_ref[...].astype(jnp.float32)
    min_ref[...] = blk.min(axis=-1, keepdims=True).astype(min_ref.dtype)
    max_ref[...] = blk.max(axis=-1, keepdims=True).astype(max_ref.dtype)


def _minmax_multi_tile_kernel(F, TF, NJ, x_ref, min_ref, max_ref, mn_scr, mx_scr):
    """Running elementwise min/max in VMEM scratch; reduce + store once at the end.

    grid = (row_tiles, feature_tiles); feature axis is the innermost reduction.
    """
    j = pl.program_id(1)
    ragged = (F % TF) != 0          # static Python bool

    @pl.when(j == 0)
    def _init():
        mn_scr[...] = jnp.full(mn_scr.shape, jnp.inf, mn_scr.dtype)
        mx_scr[...] = jnp.full(mx_scr.shape, -jnp.inf, mx_scr.dtype)

    blk = x_ref[...].astype(jnp.float32)

    if not ragged:
        mn_scr[...] = jnp.minimum(mn_scr[...], blk)
        mx_scr[...] = jnp.maximum(mx_scr[...], blk)
    else:
        @pl.when(j < NJ - 1)
        def _body():
            mn_scr[...] = jnp.minimum(mn_scr[...], blk)
            mx_scr[...] = jnp.maximum(mx_scr[...], blk)

        @pl.when(j == NJ - 1)
        def _body_last():
            # Mask lanes past the true feature extent of the ragged last tile.
            col = lax.broadcasted_iota(jnp.int32, blk.shape, 1) + (NJ - 1) * TF
            valid = col < F
            mn_scr[...] = jnp.minimum(mn_scr[...], jnp.where(valid, blk, jnp.inf))
            mx_scr[...] = jnp.maximum(mx_scr[...], jnp.where(valid, blk, -jnp.inf))

    @pl.when(j == NJ - 1)
    def _epilogue():
        min_ref[...] = mn_scr[...].min(axis=-1, keepdims=True).astype(min_ref.dtype)
        max_ref[...] = mx_scr[...].max(axis=-1, keepdims=True).astype(max_ref.dtype)


@functools.partial(jax.jit, static_argnames=("tile_budget_bytes",))
def _minmax_per_row(x2d, tile_budget_bytes=_TILE_BUDGET_BYTES):
    """Pallas-backed per-row (axis=-1) min/max of a 2D array -> ((R,), (R,))."""
    if not jnp.issubdtype(x2d.dtype, jnp.floating):
        x2d = x2d.astype(jnp.float32)
    R, F = x2d.shape
    out_dtype = x2d.dtype
    TR, TF = _choose_tiles(R, F, x2d.dtype.itemsize, tile_budget_bytes)
    NI = pl.cdiv(R, TR)
    NJ = pl.cdiv(F, TF)

    if NJ == 1:
        kernel = _minmax_single_tile_kernel
        scratch = []
    else:
        kernel = functools.partial(_minmax_multi_tile_kernel, F, TF, NJ)
        scratch = [
            pltpu.VMEM((TR, TF), jnp.float32),
            pltpu.VMEM((TR, TF), jnp.float32),
        ]

    mins, maxs = pl.pallas_call(
        kernel,
        out_shape=(
            jax.ShapeDtypeStruct((R, 1), out_dtype),
            jax.ShapeDtypeStruct((R, 1), out_dtype),
        ),
        grid_spec=pltpu.PrefetchScalarGridSpec(
            num_scalar_prefetch=0,
            grid=(NI, NJ),
            in_specs=[pl.BlockSpec((TR, TF), lambda i, j: (i, j))],
            out_specs=[
                pl.BlockSpec((TR, 1), lambda i, j: (i, 0)),
                pl.BlockSpec((TR, 1), lambda i, j: (i, 0)),
            ],
            scratch_shapes=scratch,
        ),
        compiler_params=pltpu.CompilerParams(
            dimension_semantics=("parallel", "arbitrary"),  # rows sharded, feats reduced
            vmem_limit_bytes=_VMEM_LIMIT_BYTES,
        ),
    )(x2d)
    return mins[:, 0], maxs[:, 0]


def _pick_global_rows(n):
    """Row count for the global-reduction slab: a divisor of n that is a multiple
    of 8 (full sublane/DMA use) while keeping >=128 columns; fall back to 1."""
    for r in (2048, 1024, 512, 256, 128, 64, 32, 16, 8):
        if n % r == 0 and n // r >= 128:
            return r
    return 1


def _global_minmax(x):
    """Global min/max over the whole tensor using a tall 2D slab (no (1,N) row)."""
    flat = x.reshape(-1)
    n = flat.shape[0]
    rows = _pick_global_rows(n)
    x2d = flat.reshape(rows, n // rows)
    m, M = _minmax_per_row(x2d)
    return jnp.min(m), jnp.max(M)


class CurrentMinMaxEstimator:
    """JAX/Pallas port of aihwkit's CurrentMinMaxEstimator forward pass."""

    def __init__(self, percentile=None, per_channel=False, quantizer=None,
                 axis=None, n_groups=None):
        self.percentile = percentile
        self.per_channel = per_channel
        self.quantizer = quantizer
        self.axis = axis
        self.n_groups = n_groups
        self.per_group_range_estimation = False
        self.ranges = None
        self.current_xmin = None
        self.current_xmax = None

    def reset(self):
        self.current_xmin = None
        self.current_xmax = None

    def __call__(self, x):
        return self.forward(x)

    def forward(self, x):
        x = jnp.asarray(x)
        if not jnp.issubdtype(x.dtype, jnp.floating):
            x = x.astype(jnp.float32)

        if self.per_group_range_estimation:
            assert self.axis != 0
            xt = jnp.swapaxes(x, 0, self.axis)
            x2d = xt.reshape(xt.shape[0], -1)
            mins, maxs = _minmax_per_row(x2d)
            ranges = maxs - mins
            if self.ranges is None:
                self.ranges = ranges
            else:
                momentum = 0.1
                # NOTE: faithful to the original code (which uses `ranges` twice).
                self.ranges = momentum * ranges + (1 - momentum) * ranges
            return None

        if self.axis is not None:
            if self.axis != 0:
                x = jnp.swapaxes(x, 0, self.axis)
            x2d = x.reshape(x.shape[0], -1)
            if self.n_groups is not None:
                ng = self.n_groups
                assert ng > 0 and x2d.shape[0] % ng == 0
                gs = x2d.shape[0] // ng
                perm = None
                if self.ranges is not None:
                    perm = jnp.argsort(self.ranges)   # glue: row permutation
                    x2d = x2d[perm]
                xg = x2d.reshape(ng, -1)
                m, M = _minmax_per_row(xg)
                m = jnp.repeat(m, gs)
                M = jnp.repeat(M, gs)
                if perm is not None:
                    inv = jnp.argsort(perm)           # P.T.mv == inverse permutation
                    m = m[inv]
                    M = M[inv]
                self.current_xmin = m
                self.current_xmax = M
            else:
                m, M = _minmax_per_row(x2d)
                self.current_xmin = m
                self.current_xmax = M

        elif self.per_channel:
            x2d = x.reshape(x.shape[0], -1)
            if self.percentile:
                # TODO(synk): np.percentile (sort-based) has no clean Pallas
                # equivalent; computed with jnp.percentile in plain JAX.
                x_min = jnp.percentile(x2d, self.percentile, axis=-1)
                x_max = jnp.percentile(x2d, 100 - self.percentile, axis=-1)
                self.current_xmin = x_min
                self.current_xmax = x_max
            else:
                m, M = _minmax_per_row(x2d)
                self.current_xmin = m
                self.current_xmax = M

        elif self.percentile:
            # TODO(synk): percentile path uses jnp.percentile (no Pallas sort).
            flat = x.reshape(-1)
            x_min = jnp.atleast_1d(jnp.percentile(flat, self.percentile))
            x_max = jnp.atleast_1d(jnp.percentile(flat, 100.0))
            self.current_xmin = x_min
            self.current_xmax = x_max

        else:
            # Global min / max over the whole tensor -> 0-d results.
            gmin, gmax = _global_minmax(x)
            self.current_xmin = gmin
            self.current_xmax = gmax

        return (self.current_xmin, self.current_xmax)


if __name__ == "__main__":
    key = jax.random.PRNGKey(0)
    x = jax.random.normal(key, (2, 4, 16, 16), dtype=jnp.float32)  # NCHW

    # 1) default: global min/max (0-d outputs) — tall-slab path
    est_global = CurrentMinMaxEstimator()
    gmin, gmax = est_global(x)
    gmin, gmax = jax.block_until_ready((gmin, gmax))
    assert gmin.shape == () and gmax.shape == ()
    assert jnp.allclose(gmin, jnp.min(x)) and jnp.allclose(gmax, jnp.max(x))

    # 2) per_channel=True: per-batch-row min/max, shape (N,)
    est_pc = CurrentMinMaxEstimator(per_channel=True)
    pmin, pmax = est_pc(x)
    pmin, pmax = jax.block_until_ready((pmin, pmax))
    xf = x.reshape(x.shape[0], -1)
    assert jnp.allclose(pmin, xf.min(-1)) and jnp.allclose(pmax, xf.max(-1))

    # 3) axis=1: per-channel (C) min/max, shape (C,)
    est_ax = CurrentMinMaxEstimator(axis=1)
    amin, amax = est_ax(x)
    amin, amax = jax.block_until_ready((amin, amax))
    xt = jnp.swapaxes(x, 0, 1).reshape(x.shape[1], -1)
    assert jnp.allclose(amin, xt.min(-1)) and jnp.allclose(amax, xt.max(-1))

    # 4) stress the multi-tile + ragged-last-tile (in-kernel mask) path by
    #    forcing a tiny tile budget so F=1000 splits into 2 feature tiles.
    xr = jax.random.normal(jax.random.PRNGKey(1), (8, 1000), dtype=jnp.float32)
    rmin, rmax = _minmax_per_row(xr, tile_budget_bytes=64 * 1024)
    rmin, rmax = jax.block_until_ready((rmin, rmax))
    assert jnp.allclose(rmin, xr.min(-1)) and jnp.allclose(rmax, xr.max(-1))

    print("KERNEL_OK")
</pallas_src>

<mosaic_0001>
module attributes {stable_mosaic.version = 11 : i64} {
  func.func @_minmax_single_tile_kernel(%arg0: i32, %arg1: i32, %arg2: memref<16x128xf32, #tpu.memory_space<vmem>>, %arg3: memref<16x1xf32, #tpu.memory_space<vmem>>, %arg4: memref<16x1xf32, #tpu.memory_space<vmem>>) attributes {dimension_semantics = [#tpu.dimension_semantics<parallel>, #tpu.dimension_semantics<arbitrary>], iteration_bounds = array<i64: 1, 1>, scalar_prefetch = 0 : i64, scratch_operands = 0 : i64, tpu.core_type = #tpu.core_type<tc>, window_params = [{transform_indices = @transform_0, window_bounds = array<i64: 16, 128>}, {transform_indices = @transform_1, window_bounds = array<i64: 16, 1>}, {transform_indices = @transform_2, window_bounds = array<i64: 16, 1>}]} {
    %c0 = arith.constant 0 : index
    %c0_0 = arith.constant 0 : index
    %0 = vector.load %arg2[%c0, %c0_0] : memref<16x128xf32, #tpu.memory_space<vmem>>, vector<16x128xf32>
    %cst = arith.constant dense<0x7F800000> : vector<16xf32>
    %1 = vector.multi_reduction <minimumf>, %0, %cst [1] : vector<16x128xf32> to vector<16xf32>
    %2 = vector.shape_cast %1 : vector<16xf32> to vector<16x1xf32>
    %c0_1 = arith.constant 0 : index
    %c0_2 = arith.constant 0 : index
    %3 = vector.load %arg3[%c0_1, %c0_2] : memref<16x1xf32, #tpu.memory_space<vmem>>, vector<16x1xf32>
    tpu.vector_store %arg3[%c0_1, %c0_2], %2 {strides = array<i32>} : memref<16x1xf32, #tpu.memory_space<vmem>>, vector<16x1xf32>,
    %cst_3 = arith.constant dense<0xFF800000> : vector<16xf32>
    %4 = vector.multi_reduction <maximumf>, %0, %cst_3 [1] : vector<16x128xf32> to vector<16xf32>
    %5 = vector.shape_cast %4 : vector<16xf32> to vector<16x1xf32>
    %c0_4 = arith.constant 0 : index
    %c0_5 = arith.constant 0 : index
    %6 = vector.load %arg4[%c0_4, %c0_5] : memref<16x1xf32, #tpu.memory_space<vmem>>, vector<16x1xf32>
    tpu.vector_store %arg4[%c0_4, %c0_5], %5 {strides = array<i32>} : memref<16x1xf32, #tpu.memory_space<vmem>>, vector<16x1xf32>,
    return
  }
  func.func @transform_0(%arg0: i32, %arg1: i32) -> (i32, i32) {
    %c0_i32 = arith.constant 0 : i32
    return %arg0, %arg1 : i32, i32
  }
  func.func @transform_1(%arg0: i32, %arg1: i32) -> (i32, i32) {
    %c0_i32 = arith.constant 0 : i32
    %c0_i32_0 = arith.constant 0 : i32
    return %arg0, %c0_i32 : i32, i32
  }
  func.func @transform_2(%arg0: i32, %arg1: i32) -> (i32, i32) {
    %c0_i32 = arith.constant 0 : i32
    %c0_i32_0 = arith.constant 0 : i32
    return %arg0, %c0_i32 : i32, i32
  }
}

</mosaic_0001>

<llo_original>
// kernel: _minmax_per_row.1
$region0: #{_minmax_per_row.1}
  #allocation0 [shape = 'u32[]', space=smem, size = 0x4, offset = 0x4, fixed_abs, tag = 'smem constant byte address 0x4 - core index']
  #allocation1 [shape = 'u32[144,128]{1,0:T(1,128)}', space=vmem, size = 0x12000, scoped, tag = 'internal scratch']
  %s0 = inlined_call_operand.hbm [shape: f32[16,128], index: 0, kind: input, shape index: {}]
  %s1 = inlined_call_operand.vmem [shape: f32[16,1], index: 1, kind: output, shape index: {0}]
  %s2 = inlined_call_operand.vmem [shape: f32[16,1], index: 2, kind: output, shape index: {1}]
  %3 = xla_tuple %s1, %s2
  %s4 = sld [smem:[#allocation0]]
  $region26: #{_minmax_per_row.1} parent=0
    _
  %s6 = ssub.s32 1, %s4
  %s7 = scalar_select 0, %s6, %s4
  $region1: #{_minmax_per_row.1} parent=0
    #allocation2 [shape = 'u8[8192]{0}', space=vmem, size = 0x2000, scoped, tag = 'input window, operand 0, single buffered']
    #allocation3 [shape = 's32[1]{0}', space=sflag, size = 0x4, scoped, tag = 'scoped memory for _minmax_per_row.1']
    %8 = vsyncpa [#allocation3], 0
    // Predicated region
    $region2: #{_minmax_per_row.1} parent=1 // pred_check
      _
    $region3: #{_minmax_per_row.1} parent=1 // pred_check_branch
      %10 = sbr.rel (0) target = $region5
    $region4: #{_minmax_per_row.1} parent=1 // pred_region
      %s12 = ssub.s32 256, 256
      %13 = vsyncadd [#allocation3], %s12
      %s14 = sshll.u32 [#allocation2], 4
      %s15 = int_to_ptr.vmem [resolvable:$true] %s14
      %20 = dma.hbm_to_vmem [thread:$0]  %s0, 256, %s15, [#allocation3], 128, 128, 8
    $region5: #{_minmax_per_row.1} parent=1 // pred_fallthru
      _
    // Predicated region
    $region6: #{_minmax_per_row.1} parent=1 // pred_check
      _
    $region7: #{_minmax_per_row.1} parent=1 // pred_check_branch
      %22 = sbr.rel (0) target = $region9
    $region8: #{_minmax_per_row.1} parent=1 // pred_region
      %23 = dma.done [#allocation3], 256
    $region9: #{_minmax_per_row.1} parent=1 // pred_fallthru
      _
    %v24 = vld [vmem:[#allocation2] sm:$0xff]
    %v25 = vld [vmem:[#allocation2 + $0x8] sm:$0xff]
    %26 = vmin.xlane.f32.xlu0 %v24
    %v27 = vpop.xlane.xlu0 %26
    %28 = vmin.xlane.f32.xlu0 %v25
    %v29 = vpop.xlane.xlu0 %28
    %vm30 = vcmask 7168
    %31 = vst.msk [vmem:[%s1] sm:$0xff] %vm30, %v27
    %32 = vst.msk [vmem:[%s1 + $0x8] sm:$0xff] %vm30, %v29
    %33 = vmax.xlane.f32.xlu0 %v24
    %v34 = vpop.xlane.xlu0 %33
    %35 = vmax.xlane.f32.xlu0 %v25
    %v36 = vpop.xlane.xlu0 %35
    %37 = vst.msk [vmem:[%s2] sm:$0xff] %vm30, %v34
    %38 = vst.msk [vmem:[%s2 + $0x8] sm:$0xff] %vm30, %v36
    // Predicated region
    $region10: #{_minmax_per_row.1} parent=1 // pred_check
      _
    $region11: #{_minmax_per_row.1} parent=1 // pred_check_branch
      %40 = sbr.rel (0) target = $region13
    $region12: #{_minmax_per_row.1} parent=1 // pred_region
      _
    $region13: #{_minmax_per_row.1} parent=1 // pred_fallthru
      _
    // Predicated region
    $region14: #{_minmax_per_row.1} parent=1 // pred_check
      _
    $region15: #{_minmax_per_row.1} parent=1 // pred_check_branch
      %42 = sbr.rel (0) target = $region17
    $region16: #{_minmax_per_row.1} parent=1 // pred_region
      _
    $region17: #{_minmax_per_row.1} parent=1 // pred_fallthru
      _
    // Predicated region
    $region18: #{_minmax_per_row.1} parent=1 // pred_check
      _
    $region19: #{_minmax_per_row.1} parent=1 // pred_check_branch
      %44 = sbr.rel (0) target = $region21
    $region20: #{_minmax_per_row.1} parent=1 // pred_region
      _
    $region21: #{_minmax_per_row.1} parent=1 // pred_fallthru
      _
    // Predicated region
    $region22: #{_minmax_per_row.1} parent=1 // pred_check
      _
    $region23: #{_minmax_per_row.1} parent=1 // pred_check_branch
      %46 = sbr.rel (0) target = $region25
    $region24: #{_minmax_per_row.1} parent=1 // pred_region
      _
    $region25: #{_minmax_per_row.1} parent=1 // pred_fallthru
      _
    %47 = vsyncpa [#allocation3], 1

</llo_original>
